<compile_context>
chip_gen: v7x
topology: tpu7x:2x2x1
jax: 0.10.0
libtpu: 0.0.40
codegen_flags: <defaults>
</compile_context>

<pallas_src>
import functools

import numpy as np
import jax
import jax.numpy as jnp
from jax.experimental import pallas as pl
from jax.experimental.pallas import tpu as pltpu

# Bicubic weights for frac = 0.5, A = -0.75 (exact binary fractions).
_W0 = -0.09375
_W1 = 0.59375


def _downsample_kernel(xph_ref, halo_ref, w_ref, o_ref, *, Cin, Cout):
    # xph_ref : (4*Cin, TH, Wo)  VMEM.  Phase-channel blocks (row-parity, col-parity):
    #           [0:Cin]=ee, [Cin:2Cin]=eo, [2Cin:3Cin]=oe, [3Cin:4Cin]=oo.
    #           Phase-row r of this tile == input rows 2*(t*TH+r) / 2*(t*TH+r)+1.
    # halo_ref: (4*Cin, 1, Wo)   VMEM.  [0:2Cin] = clamped input row just ABOVE the
    #           tile (even/odd cols), [2Cin:4Cin] = clamped row just BELOW the tile.
    # w_ref   : (Cout, Cin)      SMEM.  1x1 conv weight, read as scalars.
    # o_ref   : (Cout, TH, Wo)   VMEM output tile.

    def col_pass(e, o):
        # Horizontal bicubic at stride 2 on even/odd column phases:
        #   out[.., ow] = W1*(e[ow] + o[ow]) + W0*(o[ow-1] + e[ow+1]),
        # with border replication: o[-1] -> e[0],  e[Wo] -> o[Wo-1].
        o_prev = jnp.concatenate([e[..., :1], o[..., :-1]], axis=-1)
        e_next = jnp.concatenate([e[..., 1:], o[..., -1:]], axis=-1)
        return _W1 * (e + o) + _W0 * (o_prev + e_next)

    ee = xph_ref[0 * Cin:1 * Cin, :, :]
    eo = xph_ref[1 * Cin:2 * Cin, :, :]
    oe = xph_ref[2 * Cin:3 * Cin, :, :]
    oo = xph_ref[3 * Cin:4 * Cin, :, :]

    top_e = halo_ref[0 * Cin:1 * Cin, :, :]
    top_o = halo_ref[1 * Cin:2 * Cin, :, :]
    bot_e = halo_ref[2 * Cin:3 * Cin, :, :]
    bot_o = halo_ref[3 * Cin:4 * Cin, :, :]

    # --- horizontal (column) pass ---
    he = col_pass(ee, eo)                       # (Cin, TH, Wo)  even input rows
    ho = col_pass(oe, oo)                       # (Cin, TH, Wo)  odd input rows
    h_top = col_pass(top_e, top_o)              # (Cin, 1,  Wo)  row above the tile
    h_bot = col_pass(bot_e, bot_o)              # (Cin, 1,  Wo)  row below the tile

    # --- vertical (row) pass ---
    #   ds[r] = W1*(he[r] + ho[r]) + W0*(ho[r-1] + he[r+1])
    # with the cross-tile / clamped taps supplied by the halo rows.
    ho_prev = jnp.concatenate([h_top, ho[:, :-1, :]], axis=1)
    he_next = jnp.concatenate([he[:, 1:, :], h_bot], axis=1)
    ds = _W1 * (he + ho) + _W0 * (ho_prev + he_next)          # (Cin, TH, Wo)

    # --- 1x1 conv, no bias: Cout planes of VPU FMAs with SMEM scalar weights ---
    # TODO(synk): for production channel counts (Cin/Cout >= ~64) switch to a
    #             channel-tiled bf16 MXU matmul path instead of scalar FMAs.
    # TODO(synk): fuse the passes over 8-row strips (lax.fori_loop, unroll=True) to
    #             keep he/ho/ds in vregs instead of whole-tile VMEM temporaries.
    for co in range(Cout):
        acc = w_ref[co, 0] * ds[0]
        for ci in range(1, Cin):
            acc = acc + w_ref[co, ci] * ds[ci]
        o_ref[co, :, :] = acc


def _vmem_budget_bytes():
    """(tile-sizing budget, scoped vmem limit) sized per TPU generation."""
    cap = 64 * 1024 * 1024                      # conservative default (v7x-sized)
    try:
        info = pltpu.get_tpu_info()
        cap = int(getattr(info, "vmem_capacity_bytes", cap))
    except Exception:
        pass
    budget = min(int(cap * 0.40), 56 * 1024 * 1024)   # v6e/v5e ~51 MiB, v7x ~25 MiB
    limit = min(int(cap * 0.75), 110 * 1024 * 1024)   # v6e/v5e ~96 MiB, v7x ~48 MiB
    return budget, limit


def _pick_row_tile(N, Ho, Wo, Cin, Cout, budget_bytes):
    """Largest output-row tile whose working set fits the per-generation budget."""
    wo_pad = -(-Wo // 128) * 128                # lane round-up of the minor dim
    # Per output row (f32 bytes):
    #   2x double-buffered phase input rows (8*Cin), 2x output rows (2*Cout),
    #   he/ho/ds + shift temporaries (~6*Cin).
    per_row = (14 * Cin + 2 * Cout) * wo_pad * 4
    th_max = max(8, budget_bytes // per_row)
    if Ho <= th_max:
        th = Ho
    else:
        th = 0
        for cand in range(8, int(th_max) + 1, 8):   # multiple of 8 that divides Ho
            if Ho % cand == 0:
                th = cand
        if th == 0:
            # TODO(synk): no multiple-of-8 divisor of Ho fits the budget; fall back to a
            #             full-height tile (only reachable for unusual Ho values).
            th = Ho
    # v7x megacore: prefer an even number of (batch x row-tile) grid steps.
    nt = max(1, Ho // th)
    if (N * nt) % 2 == 1 and th % 16 == 0:
        th //= 2
    return th


@jax.jit
def downsample(x_nchw, conv_w):
    """x_nchw: (N, Cin, H, W) float; conv_w: (Cout, Cin, 1, 1) float.

    Returns (N, Cout, H//2, W//2) float32, matching DownSample.forward.
    """
    N, Cin, H, W = x_nchw.shape
    Cout = conv_w.shape[0]
    assert H % 2 == 0 and W % 2 == 0, "even spatial sizes only"
    # TODO(synk): odd spatial sizes need an asymmetric tail tap; not required here.
    Ho, Wo = H // 2, W // 2

    budget, vmem_limit = _vmem_budget_bytes()
    TH = _pick_row_tile(N, Ho, Wo, Cin, Cout, budget)
    NT = Ho // TH

    x = x_nchw.astype(jnp.float32)

    # Single even/odd (row-parity x col-parity) de-interleave; W stays on lanes, width
    # is exactly Wo.  This is the only input-sized wrapper materialization left.
    xph = jnp.concatenate(
        [x[:, :, 0::2, 0::2], x[:, :, 0::2, 1::2],
         x[:, :, 1::2, 0::2], x[:, :, 1::2, 1::2]], axis=1)        # (N, 4*Cin, Ho, Wo)

    # Tiny per-tile vertical halo (2 rows per tile) with PyTorch border replication
    # baked in: row above the tile = clamp(2*t*TH - 1), row below = clamp(2*t*TH + 2*TH).
    t_idx = np.arange(NT)
    top_rows = np.clip(2 * t_idx * TH - 1, 0, H - 1)
    bot_rows = np.clip(2 * t_idx * TH + 2 * TH, 0, H - 1)
    top = x[:, :, top_rows, :]                                      # (N, Cin, NT, W)
    bot = x[:, :, bot_rows, :]                                      # (N, Cin, NT, W)
    halo = jnp.concatenate(
        [top[..., 0::2], top[..., 1::2], bot[..., 0::2], bot[..., 1::2]],
        axis=1)                                                     # (N, 4*Cin, NT, Wo)
    halo = jnp.transpose(halo, (0, 2, 1, 3))[:, :, :, None, :]      # (N, NT, 4*Cin, 1, Wo)

    w2 = conv_w[:, :, 0, 0].astype(jnp.float32)                     # (Cout, Cin)

    kern = functools.partial(_downsample_kernel, Cin=Cin, Cout=Cout)
    flops = N * Ho * Wo * Cin * 14 + 2 * N * Ho * Wo * Cin * Cout
    bytes_accessed = (xph.size + halo.size + w2.size) * 4 + N * Cout * Ho * Wo * 4

    # TODO(synk): when Wo is not a multiple of 128, a lane-dense (Cout, TH*Wo) output
    #             layout would turn masked vst.msk stores into full vst stores.
    # TODO(synk): optional bf16 input/temporaries (f32 accumulation) would halve HBM
    #             traffic on v6e/v7x; kept f32 here for exact parity with the reference.
    out = pl.pallas_call(
        kern,
        out_shape=jax.ShapeDtypeStruct((N, Cout, Ho, Wo), jnp.float32),
        grid=(N, NT),
        in_specs=[
            pl.BlockSpec((None, 4 * Cin, TH, Wo), lambda n, t: (n, 0, t, 0)),
            pl.BlockSpec((None, None, 4 * Cin, 1, Wo), lambda n, t: (n, t, 0, 0, 0)),
            pl.BlockSpec(memory_space=pltpu.MemorySpace.SMEM),       # (Cout, Cin) weights
        ],
        out_specs=pl.BlockSpec((None, Cout, TH, Wo), lambda n, t: (n, 0, t, 0)),
        compiler_params=pltpu.CompilerParams(
            dimension_semantics=("parallel", "parallel"),
            vmem_limit_bytes=vmem_limit),
        cost_estimate=pl.CostEstimate(flops=flops, transcendentals=0,
                                      bytes_accessed=bytes_accessed),
    )(xph, halo, w2)
    return out


def _reference(x_nchw, conv_w):
    """Pure-JAX reference with explicit clamped gather (independent code path)."""
    N, C, H, W = x_nchw.shape
    Ho, Wo = H // 2, W // 2
    wts = (-0.09375, 0.59375, 0.59375, -0.09375)
    oh = jnp.arange(Ho)
    ow = jnp.arange(Wo)
    acc = jnp.zeros((N, C, Ho, Wo), jnp.float32)
    for i in range(4):
        r = jnp.clip(2 * oh + (i - 1), 0, H - 1)
        for j in range(4):
            c = jnp.clip(2 * ow + (j - 1), 0, W - 1)
            acc = acc + wts[i] * wts[j] * x_nchw[:, :, r[:, None], c[None, :]]
    return jnp.einsum("nchw,oc->nohw", acc, conv_w[:, :, 0, 0])


if __name__ == "__main__":
    key = jax.random.PRNGKey(0)
    k_x, k_w = jax.random.split(key)

    N, Cin, H, W = 2, 4, 16, 16
    Cout = 8

    x = jax.random.normal(k_x, (N, Cin, H, W), dtype=jnp.float32)
    # Deterministic synthetic weight for nn.Conv2d(Cin, Cout, 1, bias=False): (Cout, Cin, 1, 1)
    conv_w = 0.1 * jax.random.normal(k_w, (Cout, Cin, 1, 1), dtype=jnp.float32)

    out = downsample(x, conv_w)
    out = jax.block_until_ready(out)

    ref = _reference(x, conv_w)
    assert out.shape == (N, Cout, H // 2, W // 2), out.shape
    err = float(jnp.max(jnp.abs(out - ref)))
    assert jnp.allclose(out, ref, atol=1e-4, rtol=1e-4), err

    print("KERNEL_OK")
</pallas_src>

<mosaic_0001>
module attributes {stable_mosaic.version = 11 : i64} {
  func.func @_downsample_kernel(%arg0: i32, %arg1: i32, %arg2: memref<1x16x8x8xf32, #tpu.memory_space<vmem>>, %arg3: memref<1x1x16x1x8xf32, #tpu.memory_space<vmem>>, %arg4: memref<8x4xf32, #tpu.memory_space<smem>>, %arg5: memref<1x8x8x8xf32, #tpu.memory_space<vmem>>) attributes {dimension_semantics = [#tpu.dimension_semantics<parallel>, #tpu.dimension_semantics<parallel>], iteration_bounds = array<i64: 2, 1>, scalar_prefetch = 0 : i64, scratch_operands = 0 : i64, tpu.core_type = #tpu.core_type<tc>, window_params = [{transform_indices = @transform_0, window_bounds = array<i64: 1, 16, 8, 8>}, {transform_indices = @transform_1, window_bounds = array<i64: 1, 1, 16, 1, 8>}, {transform_indices = @transform_2, window_bounds = array<i64: 8, 4>}, {transform_indices = @transform_3, window_bounds = array<i64: 1, 8, 8, 8>}]} {
    %c0 = arith.constant 0 : index
    %c0_0 = arith.constant 0 : index
    %c0_1 = arith.constant 0 : index
    %c0_2 = arith.constant 0 : index
    %0 = vector.load %arg2[%c0, %c0_0, %c0_1, %c0_2] : memref<1x16x8x8xf32, #tpu.memory_space<vmem>>, vector<1x4x8x8xf32>
    %1 = vector.shape_cast %0 : vector<1x4x8x8xf32> to vector<4x8x8xf32>
    %c0_3 = arith.constant 0 : index
    %c4 = arith.constant 4 : index
    %c0_4 = arith.constant 0 : index
    %c0_5 = arith.constant 0 : index
    %2 = vector.load %arg2[%c0_3, %c4, %c0_4, %c0_5] : memref<1x16x8x8xf32, #tpu.memory_space<vmem>>, vector<1x4x8x8xf32>
    %3 = vector.shape_cast %2 : vector<1x4x8x8xf32> to vector<4x8x8xf32>
    %c0_6 = arith.constant 0 : index
    %c8 = arith.constant 8 : index
    %c0_7 = arith.constant 0 : index
    %c0_8 = arith.constant 0 : index
    %4 = vector.load %arg2[%c0_6, %c8, %c0_7, %c0_8] : memref<1x16x8x8xf32, #tpu.memory_space<vmem>>, vector<1x4x8x8xf32>
    %5 = vector.shape_cast %4 : vector<1x4x8x8xf32> to vector<4x8x8xf32>
    %c0_9 = arith.constant 0 : index
    %c12 = arith.constant 12 : index
    %c0_10 = arith.constant 0 : index
    %c0_11 = arith.constant 0 : index
    %6 = vector.load %arg2[%c0_9, %c12, %c0_10, %c0_11] : memref<1x16x8x8xf32, #tpu.memory_space<vmem>>, vector<1x4x8x8xf32>
    %7 = vector.shape_cast %6 : vector<1x4x8x8xf32> to vector<4x8x8xf32>
    %c0_12 = arith.constant 0 : index
    %c0_13 = arith.constant 0 : index
    %c0_14 = arith.constant 0 : index
    %c0_15 = arith.constant 0 : index
    %c0_16 = arith.constant 0 : index
    %8 = vector.load %arg3[%c0_12, %c0_13, %c0_14, %c0_15, %c0_16] : memref<1x1x16x1x8xf32, #tpu.memory_space<vmem>>, vector<1x1x4x1x8xf32>
    %9 = vector.shape_cast %8 : vector<1x1x4x1x8xf32> to vector<4x1x8xf32>
    %c0_17 = arith.constant 0 : index
    %c0_18 = arith.constant 0 : index
    %c4_19 = arith.constant 4 : index
    %c0_20 = arith.constant 0 : index
    %c0_21 = arith.constant 0 : index
    %10 = vector.load %arg3[%c0_17, %c0_18, %c4_19, %c0_20, %c0_21] : memref<1x1x16x1x8xf32, #tpu.memory_space<vmem>>, vector<1x1x4x1x8xf32>
    %11 = vector.shape_cast %10 : vector<1x1x4x1x8xf32> to vector<4x1x8xf32>
    %c0_22 = arith.constant 0 : index
    %c0_23 = arith.constant 0 : index
    %c8_24 = arith.constant 8 : index
    %c0_25 = arith.constant 0 : index
    %c0_26 = arith.constant 0 : index
    %12 = vector.load %arg3[%c0_22, %c0_23, %c8_24, %c0_25, %c0_26] : memref<1x1x16x1x8xf32, #tpu.memory_space<vmem>>, vector<1x1x4x1x8xf32>
    %13 = vector.shape_cast %12 : vector<1x1x4x1x8xf32> to vector<4x1x8xf32>
    %c0_27 = arith.constant 0 : index
    %c0_28 = arith.constant 0 : index
    %c12_29 = arith.constant 12 : index
    %c0_30 = arith.constant 0 : index
    %c0_31 = arith.constant 0 : index
    %14 = vector.load %arg3[%c0_27, %c0_28, %c12_29, %c0_30, %c0_31] : memref<1x1x16x1x8xf32, #tpu.memory_space<vmem>>, vector<1x1x4x1x8xf32>
    %15 = vector.shape_cast %14 : vector<1x1x4x1x8xf32> to vector<4x1x8xf32>
    %16 = vector.extract_strided_slice %1 {offsets = [0, 0, 0], sizes = [4, 8, 1], strides = [1, 1, 1]} : vector<4x8x8xf32> to vector<4x8x1xf32>
    %17 = vector.extract_strided_slice %3 {offsets = [0, 0, 0], sizes = [4, 8, 7], strides = [1, 1, 1]} : vector<4x8x8xf32> to vector<4x8x7xf32>
    %18 = tpu.concatenate %16, %17 in 2 : vector<4x8x1xf32>, vector<4x8x7xf32> -> vector<4x8x8xf32>
    %19 = vector.extract_strided_slice %1 {offsets = [0, 0, 1], sizes = [4, 8, 7], strides = [1, 1, 1]} : vector<4x8x8xf32> to vector<4x8x7xf32>
    %20 = vector.extract_strided_slice %3 {offsets = [0, 0, 7], sizes = [4, 8, 1], strides = [1, 1, 1]} : vector<4x8x8xf32> to vector<4x8x1xf32>
    %21 = tpu.concatenate %19, %20 in 2 : vector<4x8x7xf32>, vector<4x8x1xf32> -> vector<4x8x8xf32>
    %22 = arith.addf %1, %3 : vector<4x8x8xf32>
    %cst = arith.constant 5.937500e-01 : f32
    %23 = vector.broadcast %cst : f32 to vector<4x8x8xf32>
    %24 = arith.mulf %23, %22 : vector<4x8x8xf32>
    %25 = arith.addf %18, %21 : vector<4x8x8xf32>
    %cst_32 = arith.constant -9.375000e-02 : f32
    %26 = vector.broadcast %cst_32 : f32 to vector<4x8x8xf32>
    %27 = arith.mulf %26, %25 : vector<4x8x8xf32>
    %28 = arith.addf %24, %27 : vector<4x8x8xf32>
    %29 = vector.extract_strided_slice %5 {offsets = [0, 0, 0], sizes = [4, 8, 1], strides = [1, 1, 1]} : vector<4x8x8xf32> to vector<4x8x1xf32>
    %30 = vector.extract_strided_slice %7 {offsets = [0, 0, 0], sizes = [4, 8, 7], strides = [1, 1, 1]} : vector<4x8x8xf32> to vector<4x8x7xf32>
    %31 = tpu.concatenate %29, %30 in 2 : vector<4x8x1xf32>, vector<4x8x7xf32> -> vector<4x8x8xf32>
    %32 = vector.extract_strided_slice %5 {offsets = [0, 0, 1], sizes = [4, 8, 7], strides = [1, 1, 1]} : vector<4x8x8xf32> to vector<4x8x7xf32>
    %33 = vector.extract_strided_slice %7 {offsets = [0, 0, 7], sizes = [4, 8, 1], strides = [1, 1, 1]} : vector<4x8x8xf32> to vector<4x8x1xf32>
    %34 = tpu.concatenate %32, %33 in 2 : vector<4x8x7xf32>, vector<4x8x1xf32> -> vector<4x8x8xf32>
    %35 = arith.addf %5, %7 : vector<4x8x8xf32>
    %cst_33 = arith.constant 5.937500e-01 : f32
    %36 = vector.broadcast %cst_33 : f32 to vector<4x8x8xf32>
    %37 = arith.mulf %36, %35 : vector<4x8x8xf32>
    %38 = arith.addf %31, %34 : vector<4x8x8xf32>
    %cst_34 = arith.constant -9.375000e-02 : f32
    %39 = vector.broadcast %cst_34 : f32 to vector<4x8x8xf32>
    %40 = arith.mulf %39, %38 : vector<4x8x8xf32>
    %41 = arith.addf %37, %40 : vector<4x8x8xf32>
    %42 = vector.extract_strided_slice %9 {offsets = [0, 0, 0], sizes = [4, 1, 1], strides = [1, 1, 1]} : vector<4x1x8xf32> to vector<4x1x1xf32>
    %43 = vector.extract_strided_slice %11 {offsets = [0, 0, 0], sizes = [4, 1, 7], strides = [1, 1, 1]} : vector<4x1x8xf32> to vector<4x1x7xf32>
    %44 = tpu.concatenate %42, %43 in 2 : vector<4x1x1xf32>, vector<4x1x7xf32> -> vector<4x1x8xf32>
    %45 = vector.extract_strided_slice %9 {offsets = [0, 0, 1], sizes = [4, 1, 7], strides = [1, 1, 1]} : vector<4x1x8xf32> to vector<4x1x7xf32>
    %46 = vector.extract_strided_slice %11 {offsets = [0, 0, 7], sizes = [4, 1, 1], strides = [1, 1, 1]} : vector<4x1x8xf32> to vector<4x1x1xf32>
    %47 = tpu.concatenate %45, %46 in 2 : vector<4x1x7xf32>, vector<4x1x1xf32> -> vector<4x1x8xf32>
    %48 = arith.addf %9, %11 : vector<4x1x8xf32>
    %cst_35 = arith.constant 5.937500e-01 : f32
    %49 = vector.broadcast %cst_35 : f32 to vector<4x1x8xf32>
    %50 = arith.mulf %49, %48 : vector<4x1x8xf32>
    %51 = arith.addf %44, %47 : vector<4x1x8xf32>
    %cst_36 = arith.constant -9.375000e-02 : f32
    %52 = vector.broadcast %cst_36 : f32 to vector<4x1x8xf32>
    %53 = arith.mulf %52, %51 : vector<4x1x8xf32>
    %54 = arith.addf %50, %53 : vector<4x1x8xf32>
    %55 = vector.extract_strided_slice %13 {offsets = [0, 0, 0], sizes = [4, 1, 1], strides = [1, 1, 1]} : vector<4x1x8xf32> to vector<4x1x1xf32>
    %56 = vector.extract_strided_slice %15 {offsets = [0, 0, 0], sizes = [4, 1, 7], strides = [1, 1, 1]} : vector<4x1x8xf32> to vector<4x1x7xf32>
    %57 = tpu.concatenate %55, %56 in 2 : vector<4x1x1xf32>, vector<4x1x7xf32> -> vector<4x1x8xf32>
    %58 = vector.extract_strided_slice %13 {offsets = [0, 0, 1], sizes = [4, 1, 7], strides = [1, 1, 1]} : vector<4x1x8xf32> to vector<4x1x7xf32>
    %59 = vector.extract_strided_slice %15 {offsets = [0, 0, 7], sizes = [4, 1, 1], strides = [1, 1, 1]} : vector<4x1x8xf32> to vector<4x1x1xf32>
    %60 = tpu.concatenate %58, %59 in 2 : vector<4x1x7xf32>, vector<4x1x1xf32> -> vector<4x1x8xf32>
    %61 = arith.addf %13, %15 : vector<4x1x8xf32>
    %cst_37 = arith.constant 5.937500e-01 : f32
    %62 = vector.broadcast %cst_37 : f32 to vector<4x1x8xf32>
    %63 = arith.mulf %62, %61 : vector<4x1x8xf32>
    %64 = arith.addf %57, %60 : vector<4x1x8xf32>
    %cst_38 = arith.constant -9.375000e-02 : f32
    %65 = vector.broadcast %cst_38 : f32 to vector<4x1x8xf32>
    %66 = arith.mulf %65, %64 : vector<4x1x8xf32>
    %67 = arith.addf %63, %66 : vector<4x1x8xf32>
    %68 = vector.extract_strided_slice %41 {offsets = [0, 0, 0], sizes = [4, 7, 8], strides = [1, 1, 1]} : vector<4x8x8xf32> to vector<4x7x8xf32>
    %69 = tpu.concatenate %54, %68 in 1 : vector<4x1x8xf32>, vector<4x7x8xf32> -> vector<4x8x8xf32>
    %70 = vector.extract_strided_slice %28 {offsets = [0, 1, 0], sizes = [4, 7, 8], strides = [1, 1, 1]} : vector<4x8x8xf32> to vector<4x7x8xf32>
    %71 = tpu.concatenate %70, %67 in 1 : vector<4x7x8xf32>, vector<4x1x8xf32> -> vector<4x8x8xf32>
    %72 = arith.addf %28, %41 : vector<4x8x8xf32>
    %cst_39 = arith.constant 5.937500e-01 : f32
    %73 = vector.broadcast %cst_39 : f32 to vector<4x8x8xf32>
    %74 = arith.mulf %73, %72 : vector<4x8x8xf32>
    %75 = arith.addf %69, %71 : vector<4x8x8xf32>
    %cst_40 = arith.constant -9.375000e-02 : f32
    %76 = vector.broadcast %cst_40 : f32 to vector<4x8x8xf32>
    %77 = arith.mulf %76, %75 : vector<4x8x8xf32>
    %78 = arith.addf %74, %77 : vector<4x8x8xf32>
    %c0_41 = arith.constant 0 : index
    %c0_42 = arith.constant 0 : index
    %79 = memref.load %arg4[%c0_41, %c0_42] : memref<8x4xf32, #tpu.memory_space<smem>>
    %80 = vector.extract_strided_slice %78 {offsets = [0, 0, 0], sizes = [1, 8, 8], strides = [1, 1, 1]} : vector<4x8x8xf32> to vector<1x8x8xf32>
    %81 = vector.shape_cast %80 : vector<1x8x8xf32> to vector<8x8xf32>
    %82 = vector.broadcast %79 : f32 to vector<8x8xf32>
    %83 = arith.mulf %82, %81 : vector<8x8xf32>
    %c0_43 = arith.constant 0 : index
    %c1 = arith.constant 1 : index
    %84 = memref.load %arg4[%c0_43, %c1] : memref<8x4xf32, #tpu.memory_space<smem>>
    %85 = vector.extract_strided_slice %78 {offsets = [1, 0, 0], sizes = [1, 8, 8], strides = [1, 1, 1]} : vector<4x8x8xf32> to vector<1x8x8xf32>
    %86 = vector.shape_cast %85 : vector<1x8x8xf32> to vector<8x8xf32>
    %87 = vector.broadcast %84 : f32 to vector<8x8xf32>
    %88 = arith.mulf %87, %86 : vector<8x8xf32>
    %89 = arith.addf %83, %88 : vector<8x8xf32>
    %c0_44 = arith.constant 0 : index
    %c2 = arith.constant 2 : index
    %90 = memref.load %arg4[%c0_44, %c2] : memref<8x4xf32, #tpu.memory_space<smem>>
    %91 = vector.extract_strided_slice %78 {offsets = [2, 0, 0], sizes = [1, 8, 8], strides = [1, 1, 1]} : vector<4x8x8xf32> to vector<1x8x8xf32>
    %92 = vector.shape_cast %91 : vector<1x8x8xf32> to vector<8x8xf32>
    %93 = vector.broadcast %90 : f32 to vector<8x8xf32>
    %94 = arith.mulf %93, %92 : vector<8x8xf32>
    %95 = arith.addf %89, %94 : vector<8x8xf32>
    %c0_45 = arith.constant 0 : index
    %c3 = arith.constant 3 : index
    %96 = memref.load %arg4[%c0_45, %c3] : memref<8x4xf32, #tpu.memory_space<smem>>
    %97 = vector.extract_strided_slice %78 {offsets = [3, 0, 0], sizes = [1, 8, 8], strides = [1, 1, 1]} : vector<4x8x8xf32> to vector<1x8x8xf32>
    %98 = vector.shape_cast %97 : vector<1x8x8xf32> to vector<8x8xf32>
    %99 = vector.broadcast %96 : f32 to vector<8x8xf32>
    %100 = arith.mulf %99, %98 : vector<8x8xf32>
    %101 = arith.addf %95, %100 : vector<8x8xf32>
    %c0_46 = arith.constant 0 : index
    %c0_47 = arith.constant 0 : index
    %c0_48 = arith.constant 0 : index
    %c0_49 = arith.constant 0 : index
    %102 = vector.load %arg5[%c0_46, %c0_47, %c0_48, %c0_49] : memref<1x8x8x8xf32, #tpu.memory_space<vmem>>, vector<1x1x8x8xf32>
    %103 = vector.shape_cast %102 : vector<1x1x8x8xf32> to vector<8x8xf32>
    %104 = vector.shape_cast %101 : vector<8x8xf32> to vector<1x1x8x8xf32>
    tpu.vector_store %arg5[%c0_46, %c0_47, %c0_48, %c0_49], %104 {strides = array<i32>} : memref<1x8x8x8xf32, #tpu.memory_space<vmem>>, vector<1x1x8x8xf32>,
    %c1_50 = arith.constant 1 : index
    %c0_51 = arith.constant 0 : index
    %105 = memref.load %arg4[%c1_50, %c0_51] : memref<8x4xf32, #tpu.memory_space<smem>>
    %106 = vector.extract_strided_slice %78 {offsets = [0, 0, 0], sizes = [1, 8, 8], strides = [1, 1, 1]} : vector<4x8x8xf32> to vector<1x8x8xf32>
    %107 = vector.shape_cast %106 : vector<1x8x8xf32> to vector<8x8xf32>
    %108 = vector.broadcast %105 : f32 to vector<8x8xf32>
    %109 = arith.mulf %108, %107 : vector<8x8xf32>
    %c1_52 = arith.constant 1 : index
    %c1_53 = arith.constant 1 : index
    %110 = memref.load %arg4[%c1_52, %c1_53] : memref<8x4xf32, #tpu.memory_space<smem>>
    %111 = vector.extract_strided_slice %78 {offsets = [1, 0, 0], sizes = [1, 8, 8], strides = [1, 1, 1]} : vector<4x8x8xf32> to vector<1x8x8xf32>
    %112 = vector.shape_cast %111 : vector<1x8x8xf32> to vector<8x8xf32>
    %113 = vector.broadcast %110 : f32 to vector<8x8xf32>
    %114 = arith.mulf %113, %112 : vector<8x8xf32>
    %115 = arith.addf %109, %114 : vector<8x8xf32>
    %c1_54 = arith.constant 1 : index
    %c2_55 = arith.constant 2 : index
    %116 = memref.load %arg4[%c1_54, %c2_55] : memref<8x4xf32, #tpu.memory_space<smem>>
    %117 = vector.extract_strided_slice %78 {offsets = [2, 0, 0], sizes = [1, 8, 8], strides = [1, 1, 1]} : vector<4x8x8xf32> to vector<1x8x8xf32>
    %118 = vector.shape_cast %117 : vector<1x8x8xf32> to vector<8x8xf32>
    %119 = vector.broadcast %116 : f32 to vector<8x8xf32>
    %120 = arith.mulf %119, %118 : vector<8x8xf32>
    %121 = arith.addf %115, %120 : vector<8x8xf32>
    %c1_56 = arith.constant 1 : index
    %c3_57 = arith.constant 3 : index
    %122 = memref.load %arg4[%c1_56, %c3_57] : memref<8x4xf32, #tpu.memory_space<smem>>
    %123 = vector.extract_strided_slice %78 {offsets = [3, 0, 0], sizes = [1, 8, 8], strides = [1, 1, 1]} : vector<4x8x8xf32> to vector<1x8x8xf32>
    %124 = vector.shape_cast %123 : vector<1x8x8xf32> to vector<8x8xf32>
    %125 = vector.broadcast %122 : f32 to vector<8x8xf32>
    %126 = arith.mulf %125, %124 : vector<8x8xf32>
    %127 = arith.addf %121, %126 : vector<8x8xf32>
    %c0_58 = arith.constant 0 : index
    %c1_59 = arith.constant 1 : index
    %c0_60 = arith.constant 0 : index
    %c0_61 = arith.constant 0 : index
    %128 = vector.load %arg5[%c0_58, %c1_59, %c0_60, %c0_61] : memref<1x8x8x8xf32, #tpu.memory_space<vmem>>, vector<1x1x8x8xf32>
    %129 = vector.shape_cast %128 : vector<1x1x8x8xf32> to vector<8x8xf32>
    %130 = vector.shape_cast %127 : vector<8x8xf32> to vector<1x1x8x8xf32>
    tpu.vector_store %arg5[%c0_58, %c1_59, %c0_60, %c0_61], %130 {strides = array<i32>} : memref<1x8x8x8xf32, #tpu.memory_space<vmem>>, vector<1x1x8x8xf32>,
    %c2_62 = arith.constant 2 : index
    %c0_63 = arith.constant 0 : index
    %131 = memref.load %arg4[%c2_62, %c0_63] : memref<8x4xf32, #tpu.memory_space<smem>>
    %132 = vector.extract_strided_slice %78 {offsets = [0, 0, 0], sizes = [1, 8, 8], strides = [1, 1, 1]} : vector<4x8x8xf32> to vector<1x8x8xf32>
    %133 = vector.shape_cast %132 : vector<1x8x8xf32> to vector<8x8xf32>
    %134 = vector.broadcast %131 : f32 to vector<8x8xf32>
    %135 = arith.mulf %134, %133 : vector<8x8xf32>
    %c2_64 = arith.constant 2 : index
    %c1_65 = arith.constant 1 : index
    %136 = memref.load %arg4[%c2_64, %c1_65] : memref<8x4xf32, #tpu.memory_space<smem>>
    %137 = vector.extract_strided_slice %78 {offsets = [1, 0, 0], sizes = [1, 8, 8], strides = [1, 1, 1]} : vector<4x8x8xf32> to vector<1x8x8xf32>
    %138 = vector.shape_cast %137 : vector<1x8x8xf32> to vector<8x8xf32>
    %139 = vector.broadcast %136 : f32 to vector<8x8xf32>
    %140 = arith.mulf %139, %138 : vector<8x8xf32>
    %141 = arith.addf %135, %140 : vector<8x8xf32>
    %c2_66 = arith.constant 2 : index
    %c2_67 = arith.constant 2 : index
    %142 = memref.load %arg4[%c2_66, %c2_67] : memref<8x4xf32, #tpu.memory_space<smem>>
    %143 = vector.extract_strided_slice %78 {offsets = [2, 0, 0], sizes = [1, 8, 8], strides = [1, 1, 1]} : vector<4x8x8xf32> to vector<1x8x8xf32>
    %144 = vector.shape_cast %143 : vector<1x8x8xf32> to vector<8x8xf32>
    %145 = vector.broadcast %142 : f32 to vector<8x8xf32>
    %146 = arith.mulf %145, %144 : vector<8x8xf32>
    %147 = arith.addf %141, %146 : vector<8x8xf32>
    %c2_68 = arith.constant 2 : index
    %c3_69 = arith.constant 3 : index
    %148 = memref.load %arg4[%c2_68, %c3_69] : memref<8x4xf32, #tpu.memory_space<smem>>
    %149 = vector.extract_strided_slice %78 {offsets = [3, 0, 0], sizes = [1, 8, 8], strides = [1, 1, 1]} : vector<4x8x8xf32> to vector<1x8x8xf32>
    %150 = vector.shape_cast %149 : vector<1x8x8xf32> to vector<8x8xf32>
    %151 = vector.broadcast %148 : f32 to vector<8x8xf32>
    %152 = arith.mulf %151, %150 : vector<8x8xf32>
    %153 = arith.addf %147, %152 : vector<8x8xf32>
    %c0_70 = arith.constant 0 : index
    %c2_71 = arith.constant 2 : index
    %c0_72 = arith.constant 0 : index
    %c0_73 = arith.constant 0 : index
    %154 = vector.load %arg5[%c0_70, %c2_71, %c0_72, %c0_73] : memref<1x8x8x8xf32, #tpu.memory_space<vmem>>, vector<1x1x8x8xf32>
    %155 = vector.shape_cast %154 : vector<1x1x8x8xf32> to vector<8x8xf32>
    %156 = vector.shape_cast %153 : vector<8x8xf32> to vector<1x1x8x8xf32>
    tpu.vector_store %arg5[%c0_70, %c2_71, %c0_72, %c0_73], %156 {strides = array<i32>} : memref<1x8x8x8xf32, #tpu.memory_space<vmem>>, vector<1x1x8x8xf32>,
    %c3_74 = arith.constant 3 : index
    %c0_75 = arith.constant 0 : index
    %157 = memref.load %arg4[%c3_74, %c0_75] : memref<8x4xf32, #tpu.memory_space<smem>>
    %158 = vector.extract_strided_slice %78 {offsets = [0, 0, 0], sizes = [1, 8, 8], strides = [1, 1, 1]} : vector<4x8x8xf32> to vector<1x8x8xf32>
    %159 = vector.shape_cast %158 : vector<1x8x8xf32> to vector<8x8xf32>
    %160 = vector.broadcast %157 : f32 to vector<8x8xf32>
    %161 = arith.mulf %160, %159 : vector<8x8xf32>
    %c3_76 = arith.constant 3 : index
    %c1_77 = arith.constant 1 : index
    %162 = memref.load %arg4[%c3_76, %c1_77] : memref<8x4xf32, #tpu.memory_space<smem>>
    %163 = vector.extract_strided_slice %78 {offsets = [1, 0, 0], sizes = [1, 8, 8], strides = [1, 1, 1]} : vector<4x8x8xf32> to vector<1x8x8xf32>
    %164 = vector.shape_cast %163 : vector<1x8x8xf32> to vector<8x8xf32>
    %165 = vector.broadcast %162 : f32 to vector<8x8xf32>
    %166 = arith.mulf %165, %164 : vector<8x8xf32>
    %167 = arith.addf %161, %166 : vector<8x8xf32>
    %c3_78 = arith.constant 3 : index
    %c2_79 = arith.constant 2 : index
    %168 = memref.load %arg4[%c3_78, %c2_79] : memref<8x4xf32, #tpu.memory_space<smem>>
    %169 = vector.extract_strided_slice %78 {offsets = [2, 0, 0], sizes = [1, 8, 8], strides = [1, 1, 1]} : vector<4x8x8xf32> to vector<1x8x8xf32>
    %170 = vector.shape_cast %169 : vector<1x8x8xf32> to vector<8x8xf32>
    %171 = vector.broadcast %168 : f32 to vector<8x8xf32>
    %172 = arith.mulf %171, %170 : vector<8x8xf32>
    %173 = arith.addf %167, %172 : vector<8x8xf32>
    %c3_80 = arith.constant 3 : index
    %c3_81 = arith.constant 3 : index
    %174 = memref.load %arg4[%c3_80, %c3_81] : memref<8x4xf32, #tpu.memory_space<smem>>
    %175 = vector.extract_strided_slice %78 {offsets = [3, 0, 0], sizes = [1, 8, 8], strides = [1, 1, 1]} : vector<4x8x8xf32> to vector<1x8x8xf32>
    %176 = vector.shape_cast %175 : vector<1x8x8xf32> to vector<8x8xf32>
    %177 = vector.broadcast %174 : f32 to vector<8x8xf32>
    %178 = arith.mulf %177, %176 : vector<8x8xf32>
    %179 = arith.addf %173, %178 : vector<8x8xf32>
    %c0_82 = arith.constant 0 : index
    %c3_83 = arith.constant 3 : index
    %c0_84 = arith.constant 0 : index
    %c0_85 = arith.constant 0 : index
    %180 = vector.load %arg5[%c0_82, %c3_83, %c0_84, %c0_85] : memref<1x8x8x8xf32, #tpu.memory_space<vmem>>, vector<1x1x8x8xf32>
    %181 = vector.shape_cast %180 : vector<1x1x8x8xf32> to vector<8x8xf32>
    %182 = vector.shape_cast %179 : vector<8x8xf32> to vector<1x1x8x8xf32>
    tpu.vector_store %arg5[%c0_82, %c3_83, %c0_84, %c0_85], %182 {strides = array<i32>} : memref<1x8x8x8xf32, #tpu.memory_space<vmem>>, vector<1x1x8x8xf32>,
    %c4_86 = arith.constant 4 : index
    %c0_87 = arith.constant 0 : index
    %183 = memref.load %arg4[%c4_86, %c0_87] : memref<8x4xf32, #tpu.memory_space<smem>>
    %184 = vector.extract_strided_slice %78 {offsets = [0, 0, 0], sizes = [1, 8, 8], strides = [1, 1, 1]} : vector<4x8x8xf32> to vector<1x8x8xf32>
    %185 = vector.shape_cast %184 : vector<1x8x8xf32> to vector<8x8xf32>
    %186 = vector.broadcast %183 : f32 to vector<8x8xf32>
    %187 = arith.mulf %186, %185 : vector<8x8xf32>
    %c4_88 = arith.constant 4 : index
    %c1_89 = arith.constant 1 : index
    %188 = memref.load %arg4[%c4_88, %c1_89] : memref<8x4xf32, #tpu.memory_space<smem>>
    %189 = vector.extract_strided_slice %78 {offsets = [1, 0, 0], sizes = [1, 8, 8], strides = [1, 1, 1]} : vector<4x8x8xf32> to vector<1x8x8xf32>
    %190 = vector.shape_cast %189 : vector<1x8x8xf32> to vector<8x8xf32>
    %191 = vector.broadcast %188 : f32 to vector<8x8xf32>
    %192 = arith.mulf %191, %190 : vector<8x8xf32>
    %193 = arith.addf %187, %192 : vector<8x8xf32>
    %c4_90 = arith.constant 4 : index
    %c2_91 = arith.constant 2 : index
    %194 = memref.load %arg4[%c4_90, %c2_91] : memref<8x4xf32, #tpu.memory_space<smem>>
    %195 = vector.extract_strided_slice %78 {offsets = [2, 0, 0], sizes = [1, 8, 8], strides = [1, 1, 1]} : vector<4x8x8xf32> to vector<1x8x8xf32>
    %196 = vector.shape_cast %195 : vector<1x8x8xf32> to vector<8x8xf32>
    %197 = vector.broadcast %194 : f32 to vector<8x8xf32>
    %198 = arith.mulf %197, %196 : vector<8x8xf32>
    %199 = arith.addf %193, %198 : vector<8x8xf32>
    %c4_92 = arith.constant 4 : index
    %c3_93 = arith.constant 3 : index
    %200 = memref.load %arg4[%c4_92, %c3_93] : memref<8x4xf32, #tpu.memory_space<smem>>
    %201 = vector.extract_strided_slice %78 {offsets = [3, 0, 0], sizes = [1, 8, 8], strides = [1, 1, 1]} : vector<4x8x8xf32> to vector<1x8x8xf32>
    %202 = vector.shape_cast %201 : vector<1x8x8xf32> to vector<8x8xf32>
    %203 = vector.broadcast %200 : f32 to vector<8x8xf32>
    %204 = arith.mulf %203, %202 : vector<8x8xf32>
    %205 = arith.addf %199, %204 : vector<8x8xf32>
    %c0_94 = arith.constant 0 : index
    %c4_95 = arith.constant 4 : index
    %c0_96 = arith.constant 0 : index
    %c0_97 = arith.constant 0 : index
    %206 = vector.load %arg5[%c0_94, %c4_95, %c0_96, %c0_97] : memref<1x8x8x8xf32, #tpu.memory_space<vmem>>, vector<1x1x8x8xf32>
    %207 = vector.shape_cast %206 : vector<1x1x8x8xf32> to vector<8x8xf32>
    %208 = vector.shape_cast %205 : vector<8x8xf32> to vector<1x1x8x8xf32>
    tpu.vector_store %arg5[%c0_94, %c4_95, %c0_96, %c0_97], %208 {strides = array<i32>} : memref<1x8x8x8xf32, #tpu.memory_space<vmem>>, vector<1x1x8x8xf32>,
    %c5 = arith.constant 5 : index
    %c0_98 = arith.constant 0 : index
    %209 = memref.load %arg4[%c5, %c0_98] : memref<8x4xf32, #tpu.memory_space<smem>>
    %210 = vector.extract_strided_slice %78 {offsets = [0, 0, 0], sizes = [1, 8, 8], strides = [1, 1, 1]} : vector<4x8x8xf32> to vector<1x8x8xf32>
    %211 = vector.shape_cast %210 : vector<1x8x8xf32> to vector<8x8xf32>
    %212 = vector.broadcast %209 : f32 to vector<8x8xf32>
    %213 = arith.mulf %212, %211 : vector<8x8xf32>
    %c5_99 = arith.constant 5 : index
    %c1_100 = arith.constant 1 : index
    %214 = memref.load %arg4[%c5_99, %c1_100] : memref<8x4xf32, #tpu.memory_space<smem>>
    %215 = vector.extract_strided_slice %78 {offsets = [1, 0, 0], sizes = [1, 8, 8], strides = [1, 1, 1]} : vector<4x8x8xf32> to vector<1x8x8xf32>
    %216 = vector.shape_cast %215 : vector<1x8x8xf32> to vector<8x8xf32>
    %217 = vector.broadcast %214 : f32 to vector<8x8xf32>
    %218 = arith.mulf %217, %216 : vector<8x8xf32>
    %219 = arith.addf %213, %218 : vector<8x8xf32>
    %c5_101 = arith.constant 5 : index
    %c2_102 = arith.constant 2 : index
    %220 = memref.load %arg4[%c5_101, %c2_102] : memref<8x4xf32, #tpu.memory_space<smem>>
    %221 = vector.extract_strided_slice %78 {offsets = [2, 0, 0], sizes = [1, 8, 8], strides = [1, 1, 1]} : vector<4x8x8xf32> to vector<1x8x8xf32>
    %222 = vector.shape_cast %221 : vector<1x8x8xf32> to vector<8x8xf32>
    %223 = vector.broadcast %220 : f32 to vector<8x8xf32>
    %224 = arith.mulf %223, %222 : vector<8x8xf32>
    %225 = arith.addf %219, %224 : vector<8x8xf32>
    %c5_103 = arith.constant 5 : index
    %c3_104 = arith.constant 3 : index
    %226 = memref.load %arg4[%c5_103, %c3_104] : memref<8x4xf32, #tpu.memory_space<smem>>
    %227 = vector.extract_strided_slice %78 {offsets = [3, 0, 0], sizes = [1, 8, 8], strides = [1, 1, 1]} : vector<4x8x8xf32> to vector<1x8x8xf32>
    %228 = vector.shape_cast %227 : vector<1x8x8xf32> to vector<8x8xf32>
    %229 = vector.broadcast %226 : f32 to vector<8x8xf32>
    %230 = arith.mulf %229, %228 : vector<8x8xf32>
    %231 = arith.addf %225, %230 : vector<8x8xf32>
    %c0_105 = arith.constant 0 : index
    %c5_106 = arith.constant 5 : index
    %c0_107 = arith.constant 0 : index
    %c0_108 = arith.constant 0 : index
    %232 = vector.load %arg5[%c0_105, %c5_106, %c0_107, %c0_108] : memref<1x8x8x8xf32, #tpu.memory_space<vmem>>, vector<1x1x8x8xf32>
    %233 = vector.shape_cast %232 : vector<1x1x8x8xf32> to vector<8x8xf32>
    %234 = vector.shape_cast %231 : vector<8x8xf32> to vector<1x1x8x8xf32>
    tpu.vector_store %arg5[%c0_105, %c5_106, %c0_107, %c0_108], %234 {strides = array<i32>} : memref<1x8x8x8xf32, #tpu.memory_space<vmem>>, vector<1x1x8x8xf32>,
    %c6 = arith.constant 6 : index
    %c0_109 = arith.constant 0 : index
    %235 = memref.load %arg4[%c6, %c0_109] : memref<8x4xf32, #tpu.memory_space<smem>>
    %236 = vector.extract_strided_slice %78 {offsets = [0, 0, 0], sizes = [1, 8, 8], strides = [1, 1, 1]} : vector<4x8x8xf32> to vector<1x8x8xf32>
    %237 = vector.shape_cast %236 : vector<1x8x8xf32> to vector<8x8xf32>
    %238 = vector.broadcast %235 : f32 to vector<8x8xf32>
    %239 = arith.mulf %238, %237 : vector<8x8xf32>
    %c6_110 = arith.constant 6 : index
    %c1_111 = arith.constant 1 : index
    %240 = memref.load %arg4[%c6_110, %c1_111] : memref<8x4xf32, #tpu.memory_space<smem>>
    %241 = vector.extract_strided_slice %78 {offsets = [1, 0, 0], sizes = [1, 8, 8], strides = [1, 1, 1]} : vector<4x8x8xf32> to vector<1x8x8xf32>
    %242 = vector.shape_cast %241 : vector<1x8x8xf32> to vector<8x8xf32>
    %243 = vector.broadcast %240 : f32 to vector<8x8xf32>
    %244 = arith.mulf %243, %242 : vector<8x8xf32>
    %245 = arith.addf %239, %244 : vector<8x8xf32>
    %c6_112 = arith.constant 6 : index
    %c2_113 = arith.constant 2 : index
    %246 = memref.load %arg4[%c6_112, %c2_113] : memref<8x4xf32, #tpu.memory_space<smem>>
    %247 = vector.extract_strided_slice %78 {offsets = [2, 0, 0], sizes = [1, 8, 8], strides = [1, 1, 1]} : vector<4x8x8xf32> to vector<1x8x8xf32>
    %248 = vector.shape_cast %247 : vector<1x8x8xf32> to vector<8x8xf32>
    %249 = vector.broadcast %246 : f32 to vector<8x8xf32>
    %250 = arith.mulf %249, %248 : vector<8x8xf32>
    %251 = arith.addf %245, %250 : vector<8x8xf32>
    %c6_114 = arith.constant 6 : index
    %c3_115 = arith.constant 3 : index
    %252 = memref.load %arg4[%c6_114, %c3_115] : memref<8x4xf32, #tpu.memory_space<smem>>
    %253 = vector.extract_strided_slice %78 {offsets = [3, 0, 0], sizes = [1, 8, 8], strides = [1, 1, 1]} : vector<4x8x8xf32> to vector<1x8x8xf32>
    %254 = vector.shape_cast %253 : vector<1x8x8xf32> to vector<8x8xf32>
    %255 = vector.broadcast %252 : f32 to vector<8x8xf32>
    %256 = arith.mulf %255, %254 : vector<8x8xf32>
    %257 = arith.addf %251, %256 : vector<8x8xf32>
    %c0_116 = arith.constant 0 : index
    %c6_117 = arith.constant 6 : index
    %c0_118 = arith.constant 0 : index
    %c0_119 = arith.constant 0 : index
    %258 = vector.load %arg5[%c0_116, %c6_117, %c0_118, %c0_119] : memref<1x8x8x8xf32, #tpu.memory_space<vmem>>, vector<1x1x8x8xf32>
    %259 = vector.shape_cast %258 : vector<1x1x8x8xf32> to vector<8x8xf32>
    %260 = vector.shape_cast %257 : vector<8x8xf32> to vector<1x1x8x8xf32>
    tpu.vector_store %arg5[%c0_116, %c6_117, %c0_118, %c0_119], %260 {strides = array<i32>} : memref<1x8x8x8xf32, #tpu.memory_space<vmem>>, vector<1x1x8x8xf32>,
    %c7 = arith.constant 7 : index
    %c0_120 = arith.constant 0 : index
    %261 = memref.load %arg4[%c7, %c0_120] : memref<8x4xf32, #tpu.memory_space<smem>>
    %262 = vector.extract_strided_slice %78 {offsets = [0, 0, 0], sizes = [1, 8, 8], strides = [1, 1, 1]} : vector<4x8x8xf32> to vector<1x8x8xf32>
    %263 = vector.shape_cast %262 : vector<1x8x8xf32> to vector<8x8xf32>
    %264 = vector.broadcast %261 : f32 to vector<8x8xf32>
    %265 = arith.mulf %264, %263 : vector<8x8xf32>
    %c7_121 = arith.constant 7 : index
    %c1_122 = arith.constant 1 : index
    %266 = memref.load %arg4[%c7_121, %c1_122] : memref<8x4xf32, #tpu.memory_space<smem>>
    %267 = vector.extract_strided_slice %78 {offsets = [1, 0, 0], sizes = [1, 8, 8], strides = [1, 1, 1]} : vector<4x8x8xf32> to vector<1x8x8xf32>
    %268 = vector.shape_cast %267 : vector<1x8x8xf32> to vector<8x8xf32>
    %269 = vector.broadcast %266 : f32 to vector<8x8xf32>
    %270 = arith.mulf %269, %268 : vector<8x8xf32>
    %271 = arith.addf %265, %270 : vector<8x8xf32>
    %c7_123 = arith.constant 7 : index
    %c2_124 = arith.constant 2 : index
    %272 = memref.load %arg4[%c7_123, %c2_124] : memref<8x4xf32, #tpu.memory_space<smem>>
    %273 = vector.extract_strided_slice %78 {offsets = [2, 0, 0], sizes = [1, 8, 8], strides = [1, 1, 1]} : vector<4x8x8xf32> to vector<1x8x8xf32>
    %274 = vector.shape_cast %273 : vector<1x8x8xf32> to vector<8x8xf32>
    %275 = vector.broadcast %272 : f32 to vector<8x8xf32>
    %276 = arith.mulf %275, %274 : vector<8x8xf32>
    %277 = arith.addf %271, %276 : vector<8x8xf32>
    %c7_125 = arith.constant 7 : index
    %c3_126 = arith.constant 3 : index
    %278 = memref.load %arg4[%c7_125, %c3_126] : memref<8x4xf32, #tpu.memory_space<smem>>
    %279 = vector.extract_strided_slice %78 {offsets = [3, 0, 0], sizes = [1, 8, 8], strides = [1, 1, 1]} : vector<4x8x8xf32> to vector<1x8x8xf32>
    %280 = vector.shape_cast %279 : vector<1x8x8xf32> to vector<8x8xf32>
    %281 = vector.broadcast %278 : f32 to vector<8x8xf32>
    %282 = arith.mulf %281, %280 : vector<8x8xf32>
    %283 = arith.addf %277, %282 : vector<8x8xf32>
    %c0_127 = arith.constant 0 : index
    %c7_128 = arith.constant 7 : index
    %c0_129 = arith.constant 0 : index
    %c0_130 = arith.constant 0 : index
    %284 = vector.load %arg5[%c0_127, %c7_128, %c0_129, %c0_130] : memref<1x8x8x8xf32, #tpu.memory_space<vmem>>, vector<1x1x8x8xf32>
    %285 = vector.shape_cast %284 : vector<1x1x8x8xf32> to vector<8x8xf32>
    %286 = vector.shape_cast %283 : vector<8x8xf32> to vector<1x1x8x8xf32>
    tpu.vector_store %arg5[%c0_127, %c7_128, %c0_129, %c0_130], %286 {strides = array<i32>} : memref<1x8x8x8xf32, #tpu.memory_space<vmem>>, vector<1x1x8x8xf32>,
    return
  }
  func.func @transform_0(%arg0: i32, %arg1: i32) -> (i32, i32, i32, i32) {
    %c0_i32 = arith.constant 0 : i32
    %c0_i32_0 = arith.constant 0 : i32
    %c0_i32_1 = arith.constant 0 : i32
    return %arg0, %c0_i32, %arg1, %c0_i32_0 : i32, i32, i32, i32
  }
  func.func @transform_1(%arg0: i32, %arg1: i32) -> (i32, i32, i32, i32, i32) {
    %c0_i32 = arith.constant 0 : i32
    %c0_i32_0 = arith.constant 0 : i32
    %c0_i32_1 = arith.constant 0 : i32
    %c0_i32_2 = arith.constant 0 : i32
    return %arg0, %arg1, %c0_i32, %c0_i32_0, %c0_i32_1 : i32, i32, i32, i32, i32
  }
  func.func @transform_2(%arg0: i32, %arg1: i32) -> (i32, i32) {
    %c0_i32 = arith.constant 0 : i32
    %c0_i32_0 = arith.constant 0 : i32
    %c0_i32_1 = arith.constant 0 : i32
    return %c0_i32, %c0_i32_0 : i32, i32
  }
  func.func @transform_3(%arg0: i32, %arg1: i32) -> (i32, i32, i32, i32) {
    %c0_i32 = arith.constant 0 : i32
    %c0_i32_0 = arith.constant 0 : i32
    %c0_i32_1 = arith.constant 0 : i32
    return %arg0, %c0_i32, %arg1, %c0_i32_0 : i32, i32, i32, i32
  }
}

</mosaic_0001>

<llo_original>
// kernel: downsample.1
$region0: #{downsample.1}
  #allocation0 [shape = 'u32[]', space=smem, size = 0x4, offset = 0x4, fixed_abs, tag = 'smem constant byte address 0x4 - core index']
  #allocation1 [shape = 'u32[144,128]{1,0:T(1,128)}', space=vmem, size = 0x12000, scoped, tag = 'internal scratch']
  %s0 = inlined_call_operand.vmem [shape: f32[2,16,8,8], index: 0, kind: input, shape index: {}]
  %s1 = inlined_call_operand.vmem [shape: f32[2,1,16,1,8], index: 1, kind: input, shape index: {}]
  %s2 = inlined_call_operand.vmem [shape: f32[8,4], index: 2, kind: input, shape index: {}]
  %s3 = inlined_call_operand.hbm [shape: f32[2,8,8,8], index: 3, kind: output, shape index: {}]
  %s4 = sld [smem:[#allocation0]]
  $region49: #{downsample.1} parent=0
    _
  %s6 = ssub.s32 1, %s4
  %s7 = scalar_select 0, %s6, %s4
  $region1: #{downsample.1} parent=0
    #allocation2 [shape = 'u8[4096]{0}', space=smem, size = 0x1000, scoped, tag = 'input window, operand 2, single buffered']
    #allocation3 [shape = 's32[2]{0}', space=sflag, size = 0x8, scoped, tag = 'scoped memory for downsample.1']
    #allocation4 [shape = 's32[2]{0}', space=sflag, size = 0x8, scoped, tag = 'scoped memory for downsample.1']
    #allocation5 [shape = 'u8[65536]{0}', space=vmem, size = 0x10000, scoped, tag = 'output window, operand 0']
    %8 = vsyncpa [#allocation4], 0
    %9 = vsyncpa [#allocation3], 0
    %s10 = scalar_lea.sflag [#allocation3], 1
    %11 = vsyncpa %s10, 0
    loop: start=0, step=1, limit=4
    $region2: #{downsample.1} parent=1 // loop_pre_header
      _
    $region3: #{downsample.1} parent=1 // loop_header
      %s13 = sphi 0, %s17
      %p14 = scmp.ge.s32.totalorder %s13, 4
      %s20 = sphi 0, %s32
      %s21 = sphi 0, %s28
      %s22 = sphi 0, %s20
      %s23 = sphi 0, %s21
      %s24 = sphi 0, %s22
      %s25 = sphi 0, %s23
      %s37 = sphi 0, %s39
      %s40 = sphi 0, %s37
      %s41 = sphi 0, %s40
      %s57 = sphi 0, %s41
      %s65 = sphi 0, %s67
      %s68 = sphi 0, %s65
      %s69 = sphi 0, %s68
      %s85 = sphi 0, %s69
      %s89 = sphi 0, %s89
      %s91 = sphi 0, %s89
      %s92 = sphi 0, %s91
      %s106 = sphi 0, %s92
      %s114 = sphi 0, %s116
      %s117 = sphi 0, %s114
      %s118 = sphi 0, %s117
      %s134 = sphi 0, %s118
    $region4: #{downsample.1} parent=1 // loop_header_branch
      %16 = sbr.rel (%p14) target = $region8
    $region5: #{downsample.1} parent=1 // loop_body
      %s18 = ssub.s32 %s13, 1
      %s19 = ssub.s32 %s13, 2
      %s26 = sadd.s32 1, %s21
      %p27 = scmp.ge.s32.totalorder %s26, 1
      %s28 = scalar_select %p27, 0, %s26
      %s29 = sadd.s32 1, %s20
      %s30 = scalar_select %p27, %s29, %s20
      %p31 = scmp.ge.s32.totalorder %s30, 2
      %s32 = scalar_select %p31, 0, %s30
      %s33 = ssub.s32 %s20, %s32
      %s34 = ssub.s32 %s21, %s28
      %s35 = sor.u32 %s33, %s34
      %p36 = scmp.eq.s32.totalorder %s35, 0
      %s38 = sadd.s32 %s37, 1
      %s39 = scalar_select %p36, %s37, %s38
      %p42 = pneg %p36
      %p43 = scmp.eq.s32.totalorder %s13, 1
      %p44 = por %p42, %p43
      %p45 = scmp.ne.s32.totalorder %s37, %s40
      %p46 = scmp.eq.s32.totalorder %s13, 0
      %p47 = por %p45, %p46
      %p48 = scmp.ne.s32.totalorder %s37, %s40
      %p49 = scmp.eq.s32.totalorder %s18, 1
      %p50 = por %p48, %p49
      %p51 = scmp.ne.s32.totalorder %s40, %s41
      %p52 = scmp.eq.s32.totalorder %s18, 0
      %p53 = por %p51, %p52
      %p54 = scmp.ne.s32.totalorder %s40, %s41
      %p55 = scmp.eq.s32.totalorder %s19, 1
      %p56 = por %p54, %p55
      %p58 = scmp.ne.s32.totalorder %s41, %s57
      %p59 = scmp.eq.s32.totalorder %s19, 0
      %p60 = por %p58, %p59
      %s61 = ssub.s32 %s20, %s32
      %s62 = ssub.s32 %s21, %s28
      %s63 = sor.u32 %s61, %s62
      %p64 = scmp.eq.s32.totalorder %s63, 0
      %s66 = sadd.s32 %s65, 1
      %s67 = scalar_select %p64, %s65, %s66
      %p70 = pneg %p64
      %p71 = scmp.eq.s32.totalorder %s13, 1
      %p72 = por %p70, %p71
      %p73 = scmp.ne.s32.totalorder %s65, %s68
      %p74 = scmp.eq.s32.totalorder %s13, 0
      %p75 = por %p73, %p74
      %p76 = scmp.ne.s32.totalorder %s65, %s68
      %p77 = scmp.eq.s32.totalorder %s18, 1
      %p78 = por %p76, %p77
      %p79 = scmp.ne.s32.totalorder %s68, %s69
      %p80 = scmp.eq.s32.totalorder %s18, 0
      %p81 = por %p79, %p80
      %p82 = scmp.ne.s32.totalorder %s68, %s69
      %p83 = scmp.eq.s32.totalorder %s19, 1
      %p84 = por %p82, %p83
      %p86 = scmp.ne.s32.totalorder %s69, %s85
      %p87 = scmp.eq.s32.totalorder %s19, 0
      %p88 = por %p86, %p87
      %s90 = sadd.s32 %s89, 1
      %p93 = scmp.eq.s32.totalorder %s13, 1
      %p94 = scmp.ne.s32.totalorder %s89, %s91
      %p95 = scmp.eq.s32.totalorder %s13, 0
      %p96 = por %p94, %p95
      %p97 = scmp.ne.s32.totalorder %s89, %s91
      %p98 = scmp.eq.s32.totalorder %s18, 1
      %p99 = por %p97, %p98
      %p100 = scmp.ne.s32.totalorder %s91, %s92
      %p101 = scmp.eq.s32.totalorder %s18, 0
      %p102 = por %p100, %p101
      %p103 = scmp.ne.s32.totalorder %s91, %s92
      %p104 = scmp.eq.s32.totalorder %s19, 1
      %p105 = por %p103, %p104
      %p107 = scmp.ne.s32.totalorder %s92, %s106
      %p108 = scmp.eq.s32.totalorder %s19, 0
      %p109 = por %p107, %p108
      %s110 = ssub.s32 %s20, %s32
      %s111 = ssub.s32 %s21, %s28
      %s112 = sor.u32 %s110, %s111
      %p113 = scmp.eq.s32.totalorder %s112, 0
      %s115 = sadd.s32 %s114, 1
      %s116 = scalar_select %p113, %s114, %s115
      %p119 = pneg %p113
      %p120 = scmp.eq.s32.totalorder %s13, 1
      %p121 = por %p119, %p120
      %p122 = scmp.ne.s32.totalorder %s114, %s117
      %p123 = scmp.eq.s32.totalorder %s13, 0
      %p124 = por %p122, %p123
      %p125 = scmp.ne.s32.totalorder %s114, %s117
      %p126 = scmp.eq.s32.totalorder %s18, 1
      %p127 = por %p125, %p126
      %p128 = scmp.ne.s32.totalorder %s117, %s118
      %p129 = scmp.eq.s32.totalorder %s18, 0
      %p130 = por %p128, %p129
      %p131 = scmp.ne.s32.totalorder %s117, %s118
      %p132 = scmp.eq.s32.totalorder %s19, 1
      %p133 = por %p131, %p132
      %p135 = scmp.ne.s32.totalorder %s118, %s134
      %p136 = scmp.eq.s32.totalorder %s19, 0
      %p137 = por %p135, %p136
      %p138 = scmp.le.s32.totalorder 1, %s13
      %p139 = scmp.lt.s32.totalorder %s13, 3
      %p140 = pnand %p138, %p139
      %p141 = pneg %p140
      // Predicated region
      $region9: #{downsample.1} parent=5 // pred_check
        _
      $region10: #{downsample.1} parent=5 // pred_check_branch
        %143 = sbr.rel (%p140) target = $region12
      $region11: #{downsample.1} parent=5 // pred_region
        %s144 = ssub.s32 %s13, 1
        // Predicated region
        $region13: #{downsample.1} parent=11 // pred_check
          %p145 = pneg %p102
        $region14: #{downsample.1} parent=11 // pred_check_branch
          %147 = sbr.rel (%p145) target = $region16
        $region15: #{downsample.1} parent=11 // pred_region
          %s149 = ssub.s32 128, 128
          %150 = vsyncadd [#allocation4], %s149
          %s152 = sshll.u32 %s2, 4
          %s153 = int_to_ptr.vmem [resolvable:$true] %s152
          %155 = dma.vmem_to_smem %s153, 128, [#allocation2], [#allocation4]
        $region16: #{downsample.1} parent=11 // pred_fallthru
          _
      $region12: #{downsample.1} parent=5 // pred_fallthru
        _
      %p156 = scmp.lt.s32.totalorder %s13, 2
      // Predicated region
      $region17: #{downsample.1} parent=5 // pred_check
        %p157 = pneg %p156
      $region18: #{downsample.1} parent=5 // pred_check_branch
        %159 = sbr.rel (%p157) target = $region20
      $region19: #{downsample.1} parent=5 // pred_region
        // Predicated region
        $region21: #{downsample.1} parent=19 // pred_check
          %p160 = pneg %p47
        $region22: #{downsample.1} parent=19 // pred_check_branch
          %162 = sbr.rel (%p160) target = $region24
        $region23: #{downsample.1} parent=19 // pred_region
          %p163 = scmp.lt.s32.totalorder %s20, 1
          %s164 = scalar_select %p163, %s20, 1
          %p165 = scmp.lt.s32.totalorder %s21, 0
          %s166 = scalar_select %p165, %s21, 0
          %s167 = smul.addr %s164, 16
          %s168 = sadd.s32 %s166, %s167
          %s169 = smul.addr %s168, 8
          %s170 = scalar_lea.vmem %s0, %s169
        $region24: #{downsample.1} parent=19 // pred_fallthru
          _
        // Predicated region
        $region25: #{downsample.1} parent=19 // pred_check
          %p171 = pneg %p75
        $region26: #{downsample.1} parent=19 // pred_check_branch
          %173 = sbr.rel (%p171) target = $region28
        $region27: #{downsample.1} parent=19 // pred_region
          %p174 = scmp.lt.s32.totalorder %s20, 1
          %s175 = scalar_select %p174, %s20, 1
          %p176 = scmp.lt.s32.totalorder %s21, 0
          %s177 = scalar_select %p176, %s21, 0
          %s178 = smul.addr %s177, 16
          %s179 = smul.addr %s175, 16
          %s180 = sadd.s32 %s178, %s179
          %s181 = scalar_lea.vmem %s1, %s180
        $region28: #{downsample.1} parent=19 // pred_fallthru
          _
      $region20: #{downsample.1} parent=5 // pred_fallthru
        _
      %p182 = scmp.le.s32.totalorder 1, %s13
      %p183 = scmp.lt.s32.totalorder %s13, 3
      %p184 = pnand %p182, %p183
      %p185 = pneg %p184
      // Predicated region
      $region29: #{downsample.1} parent=5 // pred_check
        _
      $region30: #{downsample.1} parent=5 // pred_check_branch
        %187 = sbr.rel (%p184) target = $region32
      $region31: #{downsample.1} parent=5 // pred_region
        %s188 = ssub.s32 %s13, 1
        // Predicated region
        $region33: #{downsample.1} parent=31 // pred_check
          %p189 = pneg %p102
        $region34: #{downsample.1} parent=31 // pred_check_branch
          %191 = sbr.rel (%p189) target = $region36
        $region35: #{downsample.1} parent=31 // pred_region
          %192 = dma.done [#allocation4], 128
        $region36: #{downsample.1} parent=31 // pred_fallthru
          _
        %193 = sfence
        %p194 = scmp.lt.s32.totalorder %s22, 1
        %s195 = scalar_select %p194, %s22, 1
        %p196 = scmp.lt.s32.totalorder %s23, 0
        %s197 = scalar_select %p196, %s23, 0
        %s198 = smul.addr %s195, 16
        %s199 = sadd.s32 %s197, %s198
        %s200 = smul.addr %s199, 8
        %s201 = scalar_lea.vmem %s0, %s200
        %p202 = pneg %p53
        %p203 = pneg %p50
        %p204 = scmp.lt.s32.totalorder %s22, 1
        %s205 = scalar_select %p204, %s22, 1
        %p206 = scmp.lt.s32.totalorder %s23, 0
        %s207 = scalar_select %p206, %s23, 0
        %s208 = smul.addr %s207, 16
        %s209 = smul.addr %s205, 16
        %s210 = sadd.s32 %s208, %s209
        %s211 = scalar_lea.vmem %s1, %s210
        %p212 = pneg %p81
        %p213 = pneg %p78
        %p214 = pneg %p102
        %p215 = pneg %p99
        %p216 = pneg %p130
        %p217 = pneg %p127
        %s218 = sand.u32 %s117, 1
        %s219 = scalar_lea.sflag [#allocation3], %s218
        %s220 = sand.u32 %s117, 1
        %s221 = smul.addr %s220, 64
        %s222 = scalar_lea.vmem [#allocation5], %s221
        %p223 = scmp.lt.s32.totalorder %s22, 1
        %s224 = scalar_select %p223, %s22, 1
        %p225 = scmp.lt.s32.totalorder %s23, 0
        %s226 = scalar_select %p225, %s23, 0
        %s227 = smul.addr %s224, 16
        %s228 = sadd.s32 %s226, %s227
        %s229 = smul.addr %s228, 8
        %s230 = scalar_lea.vmem %s0, %s229
        %p231 = scmp.lt.s32.totalorder %s22, 1
        %s232 = scalar_select %p231, %s22, 1
        %p233 = scmp.lt.s32.totalorder %s23, 0
        %s234 = scalar_select %p233, %s23, 0
        %s235 = smul.addr %s234, 16
        %s236 = smul.addr %s232, 16
        %s237 = sadd.s32 %s235, %s236
        %s238 = scalar_lea.vmem %s1, %s237
        %v239 = vld [vmem:[%s230] sm:$0xff]
        %v240 = vld [vmem:[%s230 + $0x8] sm:$0xff]
        %v241 = vld [vmem:[%s230 + $0x10] sm:$0xff]
        %v242 = vld [vmem:[%s230 + $0x18] sm:$0xff]
        %s243 = scalar_lea.vmem %s230, 32
        %v244 = vld [vmem:[%s243] sm:$0xff]
        %v245 = vld [vmem:[%s243 + $0x8] sm:$0xff]
        %v246 = vld [vmem:[%s243 + $0x10] sm:$0xff]
        %v247 = vld [vmem:[%s243 + $0x18] sm:$0xff]
        %s248 = scalar_lea.vmem %s230, 64
        %v249 = vld [vmem:[%s248] sm:$0xff]
        %v250 = vld [vmem:[%s248 + $0x8] sm:$0xff]
        %v251 = vld [vmem:[%s248 + $0x10] sm:$0xff]
        %v252 = vld [vmem:[%s248 + $0x18] sm:$0xff]
        %s253 = scalar_lea.vmem %s230, 96
        %v254 = vld [vmem:[%s253] sm:$0xff]
        %v255 = vld [vmem:[%s253 + $0x8] sm:$0xff]
        %v256 = vld [vmem:[%s253 + $0x10] sm:$0xff]
        %v257 = vld [vmem:[%s253 + $0x18] sm:$0xff]
        %v258 = vld [vmem:[%s238] sm:$0x1]
        %v259 = vld [vmem:[%s238 + $0x1] sm:$0x1]
        %v260 = vld [vmem:[%s238 + $0x2] sm:$0x1]
        %v261 = vld [vmem:[%s238 + $0x3] sm:$0x1]
        %s262 = scalar_lea.vmem %s238, 4
        %v263 = vld [vmem:[%s262] sm:$0x1]
        %v264 = vld [vmem:[%s262 + $0x1] sm:$0x1]
        %v265 = vld [vmem:[%s262 + $0x2] sm:$0x1]
        %v266 = vld [vmem:[%s262 + $0x3] sm:$0x1]
        %s267 = scalar_lea.vmem %s238, 8
        %v268 = vld [vmem:[%s267] sm:$0x1]
        %v269 = vld [vmem:[%s267 + $0x1] sm:$0x1]
        %v270 = vld [vmem:[%s267 + $0x2] sm:$0x1]
        %v271 = vld [vmem:[%s267 + $0x3] sm:$0x1]
        %s272 = scalar_lea.vmem %s238, 12
        %v273 = vld [vmem:[%s272] sm:$0x1]
        %v274 = vld [vmem:[%s272 + $0x1] sm:$0x1]
        %v275 = vld [vmem:[%s272 + $0x2] sm:$0x1]
        %v276 = vld [vmem:[%s272 + $0x3] sm:$0x1]
        %281 = vrot.lane.b32.xlu0 %v244, 1
        %v282 = vpop.permute.xlu0 %281
        %283 = vrot.lane.b32.xlu0 %v245, 1
        %v284 = vpop.permute.xlu0 %283
        %285 = vrot.lane.b32.xlu0 %v246, 1
        %v286 = vpop.permute.xlu0 %285
        %287 = vrot.lane.b32.xlu0 %v247, 1
        %v288 = vpop.permute.xlu0 %287
        %vm293 = vcmask 7168
        %v294 = vsel %vm293, %v239, %v282
        %v295 = vsel %vm293, %v240, %v284
        %v296 = vsel %vm293, %v241, %v286
        %v297 = vsel %vm293, %v242, %v288
        %302 = vrot.lane.b32.xlu0 %v239, 127
        %v303 = vpop.permute.xlu0 %302
        %304 = vrot.lane.b32.xlu0 %v240, 127
        %v305 = vpop.permute.xlu0 %304
        %306 = vrot.lane.b32.xlu0 %v241, 127
        %v307 = vpop.permute.xlu0 %306
        %308 = vrot.lane.b32.xlu0 %v242, 127
        %v309 = vpop.permute.xlu0 %308
        %vm314 = vcmask 56320
        %v315 = vsel %vm314, %v303, %v244
        %v316 = vsel %vm314, %v305, %v245
        %v317 = vsel %vm314, %v307, %v246
        %v318 = vsel %vm314, %v309, %v247
        %v319 = vadd.f32 %v239, %v244
        %v320 = vadd.f32 %v240, %v245
        %v321 = vadd.f32 %v241, %v246
        %v322 = vadd.f32 %v242, %v247
        %v323 = vmul.f32 %v319, 0.59375
        %v324 = vmul.f32 %v320, 0.59375
        %v325 = vmul.f32 %v321, 0.59375
        %v326 = vmul.f32 %v322, 0.59375
        %v327 = vadd.f32 %v294, %v315
        %v328 = vadd.f32 %v295, %v316
        %v329 = vadd.f32 %v296, %v317
        %v330 = vadd.f32 %v297, %v318
        %v331 = vmul.f32 %v327, -0.09375
        %v332 = vmul.f32 %v328, -0.09375
        %v333 = vmul.f32 %v329, -0.09375
        %v334 = vmul.f32 %v330, -0.09375
        %v335 = vadd.f32 %v323, %v331
        %v336 = vadd.f32 %v324, %v332
        %v337 = vadd.f32 %v325, %v333
        %v338 = vadd.f32 %v326, %v334
        %343 = vrot.lane.b32.xlu0 %v254, 1
        %v344 = vpop.permute.xlu0 %343
        %345 = vrot.lane.b32.xlu0 %v255, 1
        %v346 = vpop.permute.xlu0 %345
        %347 = vrot.lane.b32.xlu0 %v256, 1
        %v348 = vpop.permute.xlu0 %347
        %349 = vrot.lane.b32.xlu0 %v257, 1
        %v350 = vpop.permute.xlu0 %349
        %v355 = vsel %vm293, %v249, %v344
        %v356 = vsel %vm293, %v250, %v346
        %v357 = vsel %vm293, %v251, %v348
        %v358 = vsel %vm293, %v252, %v350
        %363 = vrot.lane.b32.xlu0 %v249, 127
        %v364 = vpop.permute.xlu0 %363
        %365 = vrot.lane.b32.xlu0 %v250, 127
        %v366 = vpop.permute.xlu0 %365
        %367 = vrot.lane.b32.xlu0 %v251, 127
        %v368 = vpop.permute.xlu0 %367
        %369 = vrot.lane.b32.xlu0 %v252, 127
        %v370 = vpop.permute.xlu0 %369
        %v375 = vsel %vm314, %v364, %v254
        %v376 = vsel %vm314, %v366, %v255
        %v377 = vsel %vm314, %v368, %v256
        %v378 = vsel %vm314, %v370, %v257
        %v379 = vadd.f32 %v249, %v254
        %v380 = vadd.f32 %v250, %v255
        %v381 = vadd.f32 %v251, %v256
        %v382 = vadd.f32 %v252, %v257
        %v383 = vmul.f32 %v379, 0.59375
        %v384 = vmul.f32 %v380, 0.59375
        %v385 = vmul.f32 %v381, 0.59375
        %v386 = vmul.f32 %v382, 0.59375
        %v387 = vadd.f32 %v355, %v375
        %v388 = vadd.f32 %v356, %v376
        %v389 = vadd.f32 %v357, %v377
        %v390 = vadd.f32 %v358, %v378
        %v391 = vmul.f32 %v387, -0.09375
        %v392 = vmul.f32 %v388, -0.09375
        %v393 = vmul.f32 %v389, -0.09375
        %v394 = vmul.f32 %v390, -0.09375
        %v395 = vadd.f32 %v383, %v391
        %v396 = vadd.f32 %v384, %v392
        %v397 = vadd.f32 %v385, %v393
        %v398 = vadd.f32 %v386, %v394
        %v403 = vlaneseq
        %v404 = vshrl.u32 %v403, 7
        %v405 = vsub.s32 0, %v404
        %v406 = vrot.slane %v263, %v405
        %v407 = vlaneseq
        %v408 = vshrl.u32 %v407, 7
        %v409 = vsub.s32 0, %v408
        %v410 = vrot.slane %v264, %v409
        %v411 = vlaneseq
        %v412 = vshrl.u32 %v411, 7
        %v413 = vsub.s32 0, %v412
        %v414 = vrot.slane %v265, %v413
        %v415 = vlaneseq
        %v416 = vshrl.u32 %v415, 7
        %v417 = vsub.s32 0, %v416
        %v418 = vrot.slane %v266, %v417
        %419 = vrot.lane.b32.xlu0 %v406, 1
        %v420 = vpop.permute.xlu0 %419
        %421 = vrot.lane.b32.xlu0 %v410, 1
        %v422 = vpop.permute.xlu0 %421
        %423 = vrot.lane.b32.xlu0 %v414, 1
        %v424 = vpop.permute.xlu0 %423
        %425 = vrot.lane.b32.xlu0 %v418, 1
        %v426 = vpop.permute.xlu0 %425
        %v431 = vsel %vm293, %v258, %v420
        %v432 = vsel %vm293, %v259, %v422
        %v433 = vsel %vm293, %v260, %v424
        %v434 = vsel %vm293, %v261, %v426
        %v439 = vlaneseq
        %v440 = vshrl.u32 %v439, 7
        %v441 = vsub.s32 0, %v440
        %v442 = vrot.slane %v258, %v441
        %v443 = vlaneseq
        %v444 = vshrl.u32 %v443, 7
        %v445 = vsub.s32 0, %v444
        %v446 = vrot.slane %v259, %v445
        %v447 = vlaneseq
        %v448 = vshrl.u32 %v447, 7
        %v449 = vsub.s32 0, %v448
        %v450 = vrot.slane %v260, %v449
        %v451 = vlaneseq
        %v452 = vshrl.u32 %v451, 7
        %v453 = vsub.s32 0, %v452
        %v454 = vrot.slane %v261, %v453
        %455 = vrot.lane.b32.xlu0 %v442, 127
        %v456 = vpop.permute.xlu0 %455
        %457 = vrot.lane.b32.xlu0 %v446, 127
        %v458 = vpop.permute.xlu0 %457
        %459 = vrot.lane.b32.xlu0 %v450, 127
        %v460 = vpop.permute.xlu0 %459
        %461 = vrot.lane.b32.xlu0 %v454, 127
        %v462 = vpop.permute.xlu0 %461
        %v467 = vsel %vm314, %v456, %v263
        %v468 = vsel %vm314, %v458, %v264
        %v469 = vsel %vm314, %v460, %v265
        %v470 = vsel %vm314, %v462, %v266
        %v471 = vadd.f32 %v258, %v263
        %v472 = vadd.f32 %v259, %v264
        %v473 = vadd.f32 %v260, %v265
        %v474 = vadd.f32 %v261, %v266
        %v475 = vmul.f32 %v471, 0.59375
        %v476 = vmul.f32 %v472, 0.59375
        %v477 = vmul.f32 %v473, 0.59375
        %v478 = vmul.f32 %v474, 0.59375
        %v479 = vadd.f32 %v431, %v467
        %v480 = vadd.f32 %v432, %v468
        %v481 = vadd.f32 %v433, %v469
        %v482 = vadd.f32 %v434, %v470
        %v483 = vmul.f32 %v479, -0.09375
        %v484 = vmul.f32 %v480, -0.09375
        %v485 = vmul.f32 %v481, -0.09375
        %v486 = vmul.f32 %v482, -0.09375
        %v487 = vadd.f32 %v475, %v483
        %v488 = vadd.f32 %v476, %v484
        %v489 = vadd.f32 %v477, %v485
        %v490 = vadd.f32 %v478, %v486
        %v495 = vlaneseq
        %v496 = vshrl.u32 %v495, 7
        %v497 = vsub.s32 0, %v496
        %v498 = vrot.slane %v273, %v497
        %v499 = vlaneseq
        %v500 = vshrl.u32 %v499, 7
        %v501 = vsub.s32 0, %v500
        %v502 = vrot.slane %v274, %v501
        %v503 = vlaneseq
        %v504 = vshrl.u32 %v503, 7
        %v505 = vsub.s32 0, %v504
        %v506 = vrot.slane %v275, %v505
        %v507 = vlaneseq
        %v508 = vshrl.u32 %v507, 7
        %v509 = vsub.s32 0, %v508
        %v510 = vrot.slane %v276, %v509
        %511 = vrot.lane.b32.xlu0 %v498, 1
        %v512 = vpop.permute.xlu0 %511
        %513 = vrot.lane.b32.xlu0 %v502, 1
        %v514 = vpop.permute.xlu0 %513
        %515 = vrot.lane.b32.xlu0 %v506, 1
        %v516 = vpop.permute.xlu0 %515
        %517 = vrot.lane.b32.xlu0 %v510, 1
        %v518 = vpop.permute.xlu0 %517
        %v523 = vsel %vm293, %v268, %v512
        %v524 = vsel %vm293, %v269, %v514
        %v525 = vsel %vm293, %v270, %v516
        %v526 = vsel %vm293, %v271, %v518
        %v531 = vlaneseq
        %v532 = vshrl.u32 %v531, 7
        %v533 = vsub.s32 0, %v532
        %v534 = vrot.slane %v268, %v533
        %v535 = vlaneseq
        %v536 = vshrl.u32 %v535, 7
        %v537 = vsub.s32 0, %v536
        %v538 = vrot.slane %v269, %v537
        %v539 = vlaneseq
        %v540 = vshrl.u32 %v539, 7
        %v541 = vsub.s32 0, %v540
        %v542 = vrot.slane %v270, %v541
        %v543 = vlaneseq
        %v544 = vshrl.u32 %v543, 7
        %v545 = vsub.s32 0, %v544
        %v546 = vrot.slane %v271, %v545
        %547 = vrot.lane.b32.xlu0 %v534, 127
        %v548 = vpop.permute.xlu0 %547
        %549 = vrot.lane.b32.xlu0 %v538, 127
        %v550 = vpop.permute.xlu0 %549
        %551 = vrot.lane.b32.xlu0 %v542, 127
        %v552 = vpop.permute.xlu0 %551
        %553 = vrot.lane.b32.xlu0 %v546, 127
        %v554 = vpop.permute.xlu0 %553
        %v559 = vsel %vm314, %v548, %v273
        %v560 = vsel %vm314, %v550, %v274
        %v561 = vsel %vm314, %v552, %v275
        %v562 = vsel %vm314, %v554, %v276
        %v563 = vadd.f32 %v268, %v273
        %v564 = vadd.f32 %v269, %v274
        %v565 = vadd.f32 %v270, %v275
        %v566 = vadd.f32 %v271, %v276
        %v567 = vmul.f32 %v563, 0.59375
        %v568 = vmul.f32 %v564, 0.59375
        %v569 = vmul.f32 %v565, 0.59375
        %v570 = vmul.f32 %v566, 0.59375
        %v571 = vadd.f32 %v523, %v559
        %v572 = vadd.f32 %v524, %v560
        %v573 = vadd.f32 %v525, %v561
        %v574 = vadd.f32 %v526, %v562
        %v575 = vmul.f32 %v571, -0.09375
        %v576 = vmul.f32 %v572, -0.09375
        %v577 = vmul.f32 %v573, -0.09375
        %v578 = vmul.f32 %v574, -0.09375
        %v579 = vadd.f32 %v567, %v575
        %v580 = vadd.f32 %v568, %v576
        %v581 = vadd.f32 %v569, %v577
        %v582 = vadd.f32 %v570, %v578
        %v587 = vrot.slane %v395, 7
        %v588 = vrot.slane %v396, 7
        %v589 = vrot.slane %v397, 7
        %v590 = vrot.slane %v398, 7
        %vm595 = vcmask 1040384
        %v596 = vsel %vm595, %v487, %v587
        %v597 = vsel %vm595, %v488, %v588
        %v598 = vsel %vm595, %v489, %v589
        %v599 = vsel %vm595, %v490, %v590
        %v604 = vrot.slane %v335, 1
        %v605 = vrot.slane %v336, 1
        %v606 = vrot.slane %v337, 1
        %v607 = vrot.slane %v338, 1
        %v616 = vlaneseq
        %v617 = vshrl.u32 %v616, 7
        %v618 = vsub.s32 0, %v617
        %v619 = vrot.slane %v579, %v618
        %v620 = vlaneseq
        %v621 = vshrl.u32 %v620, 7
        %v622 = vsub.s32 0, %v621
        %v623 = vrot.slane %v580, %v622
        %v624 = vlaneseq
        %v625 = vshrl.u32 %v624, 7
        %v626 = vsub.s32 0, %v625
        %v627 = vrot.slane %v581, %v626
        %v628 = vlaneseq
        %v629 = vshrl.u32 %v628, 7
        %v630 = vsub.s32 0, %v629
        %v631 = vrot.slane %v582, %v630
        %vm636 = vcmask 1046528
        %v637 = vsel %vm636, %v604, %v619
        %v638 = vsel %vm636, %v605, %v623
        %v639 = vsel %vm636, %v606, %v627
        %v640 = vsel %vm636, %v607, %v631
        %v641 = vadd.f32 %v335, %v395
        %v642 = vadd.f32 %v336, %v396
        %v643 = vadd.f32 %v337, %v397
        %v644 = vadd.f32 %v338, %v398
        %v645 = vmul.f32 %v641, 0.59375
        %v646 = vmul.f32 %v642, 0.59375
        %v647 = vmul.f32 %v643, 0.59375
        %v648 = vmul.f32 %v644, 0.59375
        %v649 = vadd.f32 %v596, %v637
        %v650 = vadd.f32 %v597, %v638
        %v651 = vadd.f32 %v598, %v639
        %v652 = vadd.f32 %v599, %v640
        %v653 = vmul.f32 %v649, -0.09375
        %v654 = vmul.f32 %v650, -0.09375
        %v655 = vmul.f32 %v651, -0.09375
        %v656 = vmul.f32 %v652, -0.09375
        %v657 = vadd.f32 %v645, %v653
        %v658 = vadd.f32 %v646, %v654
        %v659 = vadd.f32 %v647, %v655
        %v660 = vadd.f32 %v648, %v656
        %s661 = sld [smem:[#allocation2]]
        %v662 = vstv %s661
        %v663 = vmul.f32 %v662, %v657
        %s664 = sld [smem:[#allocation2 + $0x1]]
        %v665 = vstv %s664
        %v666 = vmul.f32 %v665, %v658
        %v667 = vadd.f32 %v663, %v666
        %s668 = sld [smem:[#allocation2 + $0x2]]
        %v669 = vstv %s668
        %v670 = vmul.f32 %v669, %v659
        %v671 = vadd.f32 %v667, %v670
        %s672 = sld [smem:[#allocation2 + $0x3]]
        %v673 = vstv %s672
        %v674 = vmul.f32 %v673, %v660
        %v675 = vadd.f32 %v671, %v674
        %vm676 = vcmask 64512
        %677 = vst.msk [vmem:[%s222] sm:$0xff] %vm676, %v675
        %s678 = sld [smem:[#allocation2 + $0x80]]
        %v679 = vstv %s678
        %v680 = vmul.f32 %v679, %v657
        %s681 = sld [smem:[#allocation2 + $0x81]]
        %v682 = vstv %s681
        %v683 = vmul.f32 %v682, %v658
        %v684 = vadd.f32 %v680, %v683
        %s685 = sld [smem:[#allocation2 + $0x82]]
        %v686 = vstv %s685
        %v687 = vmul.f32 %v686, %v659
        %v688 = vadd.f32 %v684, %v687
        %s689 = sld [smem:[#allocation2 + $0x83]]
        %v690 = vstv %s689
        %v691 = vmul.f32 %v690, %v660
        %v692 = vadd.f32 %v688, %v691
        %s693 = scalar_lea.vmem %s222, 8 [#allocation5]
        %694 = vst.msk [vmem:[%s693] sm:$0xff] %vm676, %v692
        %s695 = sld [smem:[#allocation2 + $0x100]]
        %v696 = vstv %s695
        %v697 = vmul.f32 %v696, %v657
        %s698 = sld [smem:[#allocation2 + $0x101]]
        %v699 = vstv %s698
        %v700 = vmul.f32 %v699, %v658
        %v701 = vadd.f32 %v697, %v700
        %s702 = sld [smem:[#allocation2 + $0x102]]
        %v703 = vstv %s702
        %v704 = vmul.f32 %v703, %v659
        %v705 = vadd.f32 %v701, %v704
        %s706 = sld [smem:[#allocation2 + $0x103]]
        %v707 = vstv %s706
        %v708 = vmul.f32 %v707, %v660
        %v709 = vadd.f32 %v705, %v708
        %s710 = scalar_lea.vmem %s222, 16 [#allocation5]
        %711 = vst.msk [vmem:[%s710] sm:$0xff] %vm676, %v709
        %s712 = sld [smem:[#allocation2 + $0x180]]
        %v713 = vstv %s712
        %v714 = vmul.f32 %v713, %v657
        %s715 = sld [smem:[#allocation2 + $0x181]]
        %v716 = vstv %s715
        %v717 = vmul.f32 %v716, %v658
        %v718 = vadd.f32 %v714, %v717
        %s719 = sld [smem:[#allocation2 + $0x182]]
        %v720 = vstv %s719
        %v721 = vmul.f32 %v720, %v659
        %v722 = vadd.f32 %v718, %v721
        %s723 = sld [smem:[#allocation2 + $0x183]]
        %v724 = vstv %s723
        %v725 = vmul.f32 %v724, %v660
        %v726 = vadd.f32 %v722, %v725
        %s727 = scalar_lea.vmem %s222, 24 [#allocation5]
        %728 = vst.msk [vmem:[%s727] sm:$0xff] %vm676, %v726
        %s729 = sld [smem:[#allocation2 + $0x200]]
        %v730 = vstv %s729
        %v731 = vmul.f32 %v730, %v657
        %s732 = sld [smem:[#allocation2 + $0x201]]
        %v733 = vstv %s732
        %v734 = vmul.f32 %v733, %v658
        %v735 = vadd.f32 %v731, %v734
        %s736 = sld [smem:[#allocation2 + $0x202]]
        %v737 = vstv %s736
        %v738 = vmul.f32 %v737, %v659
        %v739 = vadd.f32 %v735, %v738
        %s740 = sld [smem:[#allocation2 + $0x203]]
        %v741 = vstv %s740
        %v742 = vmul.f32 %v741, %v660
        %v743 = vadd.f32 %v739, %v742
        %s744 = scalar_lea.vmem %s222, 32 [#allocation5]
        %745 = vst.msk [vmem:[%s744] sm:$0xff] %vm676, %v743
        %s746 = sld [smem:[#allocation2 + $0x280]]
        %v747 = vstv %s746
        %v748 = vmul.f32 %v747, %v657
        %s749 = sld [smem:[#allocation2 + $0x281]]
        %v750 = vstv %s749
        %v751 = vmul.f32 %v750, %v658
        %v752 = vadd.f32 %v748, %v751
        %s753 = sld [smem:[#allocation2 + $0x282]]
        %v754 = vstv %s753
        %v755 = vmul.f32 %v754, %v659
        %v756 = vadd.f32 %v752, %v755
        %s757 = sld [smem:[#allocation2 + $0x283]]
        %v758 = vstv %s757
        %v759 = vmul.f32 %v758, %v660
        %v760 = vadd.f32 %v756, %v759
        %s761 = scalar_lea.vmem %s222, 40 [#allocation5]
        %762 = vst.msk [vmem:[%s761] sm:$0xff] %vm676, %v760
        %s763 = sld [smem:[#allocation2 + $0x300]]
        %v764 = vstv %s763
        %v765 = vmul.f32 %v764, %v657
        %s766 = sld [smem:[#allocation2 + $0x301]]
        %v767 = vstv %s766
        %v768 = vmul.f32 %v767, %v658
        %v769 = vadd.f32 %v765, %v768
        %s770 = sld [smem:[#allocation2 + $0x302]]
        %v771 = vstv %s770
        %v772 = vmul.f32 %v771, %v659
        %v773 = vadd.f32 %v769, %v772
        %s774 = sld [smem:[#allocation2 + $0x303]]
        %v775 = vstv %s774
        %v776 = vmul.f32 %v775, %v660
        %v777 = vadd.f32 %v773, %v776
        %s778 = scalar_lea.vmem %s222, 48 [#allocation5]
        %779 = vst.msk [vmem:[%s778] sm:$0xff] %vm676, %v777
        %s780 = sld [smem:[#allocation2 + $0x380]]
        %v781 = vstv %s780
        %v782 = vmul.f32 %v781, %v657
        %s783 = sld [smem:[#allocation2 + $0x381]]
        %v784 = vstv %s783
        %v785 = vmul.f32 %v784, %v658
        %v786 = vadd.f32 %v782, %v785
        %s787 = sld [smem:[#allocation2 + $0x382]]
        %v788 = vstv %s787
        %v789 = vmul.f32 %v788, %v659
        %v790 = vadd.f32 %v786, %v789
        %s791 = sld [smem:[#allocation2 + $0x383]]
        %v792 = vstv %s791
        %v793 = vmul.f32 %v792, %v660
        %v794 = vadd.f32 %v790, %v793
        %s795 = scalar_lea.vmem %s222, 56 [#allocation5]
        %796 = vst.msk [vmem:[%s795] sm:$0xff] %vm676, %v794
        %s797 = sand.u32 %s117, 1
        %s798 = scalar_lea.sflag [#allocation3], %s797
        %s799 = sand.u32 %s117, 1
        %s800 = smul.addr %s799, 64
        %s801 = scalar_lea.vmem [#allocation5], %s800
        // Predicated region
        $region37: #{downsample.1} parent=31 // pred_check
          %p802 = pneg %p127
        $region38: #{downsample.1} parent=31 // pred_check_branch
          %804 = sbr.rel (%p802) target = $region40
        $region39: #{downsample.1} parent=31 // pred_region
          %s806 = ssub.s32 1024, 1024
          %807 = vsyncadd %s798, %s806
          %s808 = smul.addr %s22, 8
          %s809 = sadd.s32 %s23, %s808
          %s810 = smul.addr %s809, 128
          %s811 = scalar_lea.hbm %s3, %s810
          %s812 = sshll.u32 %s801, 4
          %s813 = int_to_ptr.vmem [resolvable:$true] %s812
          %818 = dma.vmem_to_hbm [thread:$0]  %s813, 1024, %s811, %s798, 128, 128, 8
        $region40: #{downsample.1} parent=31 // pred_fallthru
          _
      $region32: #{downsample.1} parent=5 // pred_fallthru
        _
      %p819 = scmp.le.s32.totalorder 2, %s13
      // Predicated region
      $region41: #{downsample.1} parent=5 // pred_check
        %p820 = pneg %p819
      $region42: #{downsample.1} parent=5 // pred_check_branch
        %822 = sbr.rel (%p820) target = $region44
      $region43: #{downsample.1} parent=5 // pred_region
        %s823 = ssub.s32 %s13, 2
        // Predicated region
        $region45: #{downsample.1} parent=43 // pred_check
          %p824 = pneg %p133
        $region46: #{downsample.1} parent=43 // pred_check_branch
          %826 = sbr.rel (%p824) target = $region48
        $region47: #{downsample.1} parent=43 // pred_region
          %s827 = sand.u32 %s118, 1
          %s828 = scalar_lea.sflag [#allocation3], %s827
          %s829 = sand.u32 %s118, 1
          %s830 = smul.addr %s829, 64
          %s831 = scalar_lea.vmem [#allocation5], %s830
          %832 = dma.done %s828, 1024
        $region48: #{downsample.1} parent=43 // pred_fallthru
          _
      $region44: #{downsample.1} parent=5 // pred_fallthru
        _
    $region6: #{downsample.1} parent=1 // loop_footer
      %s17 = sadd.s32 1, %s13
    $region7: #{downsample.1} parent=1 // loop_footer_branch
      %12 = sbr.rel target = $region3
    $region8: #{downsample.1} parent=1 // loop_exit
      _
    %833 = vsyncpa [#allocation3], 1
    %s834 = scalar_lea.sflag [#allocation3], 1
    %835 = vsyncpa %s834, 1
    %836 = vsyncpa [#allocation4], 1
    %s837 = scalar_lea.sflag [#allocation4], 1
    %838 = vsyncpa %s837, 1

</llo_original>
